<compile_context>
chip_gen: v5e
topology: v5e:2x2
jax: 0.10.0
libtpu: 0.0.40
codegen_flags: <defaults>
</compile_context>

<pallas_src>
import jax
import jax.numpy as jnp
from jax.experimental import pallas as pl
from jax.experimental.pallas import tpu as pltpu


def _rbf_kernel(x_ref, c_ref, sig_ref, csq_ref, o_ref):
    # x_ref:   (TILE_N, D)   input rows for this grid step
    # c_ref:   (D, O_pad)    pre-transposed centres (resident across steps)
    # sig_ref: (1, O_pad)    per-output sigmas (resident)
    # csq_ref: (1, O_pad)    precomputed ||centres||^2 (resident)
    # o_ref:   (TILE_N, O_pad)
    x = x_ref[...]                                              # (TILE_N, D)
    c = c_ref[...]                                              # (D, O_pad)
    sig = sig_ref[...]                                          # (1, O_pad)
    csq = csq_ref[...]                                          # (1, O_pad)

    # Hot path: MXU matmul x @ c  (lane-dense RHS, f32 accumulate).
    xc = jnp.dot(x, c, preferred_element_type=jnp.float32)      # (TILE_N, O_pad)
    x_sq = jnp.sum(x * x, axis=-1, keepdims=True)               # (TILE_N, 1)

    # ||x - c||^2 = ||x||^2 - 2 x.c + ||c||^2 ; clamp tiny negatives away.
    dist2 = jnp.maximum(x_sq - 2.0 * xc + csq, 0.0)             # (TILE_N, O_pad)
    alpha = dist2 * sig                                         # (TILE_N, O_pad)
    o_ref[...] = jnp.exp(-(alpha * alpha)).astype(o_ref.dtype)  # EUP exp


def rbf_layer_forward(inp, centres, sigmas, *, tile_n=1024):
    """inp: (1, N, D); centres: (O, D); sigmas: (O,).  Returns (1, N, O)."""
    assert inp.ndim == 3 and inp.shape[0] == 1
    x = inp[0].astype(jnp.float32)                              # (N, D)
    n, d = x.shape
    o, d2 = centres.shape
    assert d == d2

    # Lane-dense output: pad O up to a multiple of 128.
    o_pad = max(128, ((o + 127) // 128) * 128)
    # Row tiling: multiple of 8, capped at tile_n; pad N up to tile boundary.
    tile_n = min(tile_n, ((n + 7) // 8) * 8)
    n_pad = ((n + tile_n - 1) // tile_n) * tile_n

    centres_f = centres.astype(jnp.float32)
    # Pre-transpose to (D, O_pad); padded columns are all-zero (sliced off later).
    c_do = jnp.zeros((d, o_pad), jnp.float32).at[:, :o].set(centres_f.T)
    # Parameter-only constants hoisted out of the kernel.
    c_sq = jnp.zeros((1, o_pad), jnp.float32).at[:, :o].set(
        jnp.sum(centres_f * centres_f, axis=-1)[None, :])
    sig = jnp.zeros((1, o_pad), jnp.float32).at[:, :o].set(
        sigmas.astype(jnp.float32)[None, :])

    x_pad = x if n_pad == n else jnp.zeros((n_pad, d), jnp.float32).at[:n].set(x)

    grid = (n_pad // tile_n,)
    out = pl.pallas_call(
        _rbf_kernel,
        out_shape=jax.ShapeDtypeStruct((n_pad, o_pad), jnp.float32),
        grid=grid,
        in_specs=[
            pl.BlockSpec((tile_n, d), lambda i: (i, 0)),        # x rows: tiled over N
            pl.BlockSpec((d, o_pad), lambda i: (0, 0)),         # centres: resident
            pl.BlockSpec((1, o_pad), lambda i: (0, 0)),         # sigmas: resident
            pl.BlockSpec((1, o_pad), lambda i: (0, 0)),         # ||c||^2: resident
        ],
        out_specs=pl.BlockSpec((tile_n, o_pad), lambda i: (i, 0)),
        compiler_params=pltpu.CompilerParams(
            dimension_semantics=("parallel",),
        ),
    )(x_pad, c_do, sig, c_sq)

    return out[:n, :o][None, ...]                               # (1, N, O)


def rbf_layer_reference(inp, centres, sigmas):
    """Pure-JAX reference mirroring the PyTorch forward literally."""
    x = inp[0]                                                  # (N, D)
    diff = x[:, None, :] - centres[None, :, :]                  # (N, O, D)
    dist = jnp.sum(diff * diff, axis=-1) * sigmas[None, :]      # (N, O)
    return jnp.exp(-(dist * dist))[None, ...]


if __name__ == "__main__":
    # Small shapes consistent with the module: batch N=8, in=32, out=64.
    N, IN_FEATURES, OUT_FEATURES = 8, 32, 64

    key = jax.random.PRNGKey(0)
    k_in, k_centres, k_in2 = jax.random.split(key, 3)

    # Deterministic parameter init matching reset_parameters():
    #   centres ~ U(-1, 1), sigmas = 10.0
    centres = jax.random.uniform(
        k_centres, (OUT_FEATURES, IN_FEATURES), jnp.float32, minval=-1.0, maxval=1.0
    )
    sigmas = jnp.full((OUT_FEATURES,), 10.0, dtype=jnp.float32)
    # freq = pi * ones((1, OUT_FEATURES))  -- unused in forward, not needed.

    inp = jax.random.normal(k_in, (1, N, IN_FEATURES), jnp.float32)

    out = rbf_layer_forward(inp, centres, sigmas)
    out = jax.block_until_ready(out)
    ref = rbf_layer_reference(inp, centres, sigmas)
    assert out.shape == (1, N, OUT_FEATURES), out.shape
    assert jnp.allclose(out, ref, atol=1e-4, rtol=1e-4), "mismatch vs reference"

    # Second check exercising the multi-tile grid + row/col padding path.
    N2 = 600                                   # not a multiple of 8 -> padded
    inp2 = jax.random.normal(k_in2, (1, N2, IN_FEATURES), jnp.float32)
    out2 = jax.block_until_ready(rbf_layer_forward(inp2, centres, sigmas, tile_n=256))
    ref2 = rbf_layer_reference(inp2, centres, sigmas)
    assert out2.shape == (1, N2, OUT_FEATURES), out2.shape
    assert jnp.allclose(out2, ref2, atol=1e-4, rtol=1e-4), "mismatch vs reference (tiled)"

    print("KERNEL_OK")
</pallas_src>

<mosaic_0001>
module attributes {stable_mosaic.version = 11 : i64} {
  func.func @_rbf_kernel(%arg0: i32, %arg1: memref<8x32xf32, #tpu.memory_space<vmem>>, %arg2: memref<32x128xf32, #tpu.memory_space<vmem>>, %arg3: memref<1x128xf32, #tpu.memory_space<vmem>>, %arg4: memref<1x128xf32, #tpu.memory_space<vmem>>, %arg5: memref<8x128xf32, #tpu.memory_space<vmem>>) attributes {dimension_semantics = [#tpu.dimension_semantics<parallel>], iteration_bounds = array<i64: 1>, scalar_prefetch = 0 : i64, scratch_operands = 0 : i64, tpu.core_type = #tpu.core_type<tc>, window_params = [{transform_indices = @transform_0, window_bounds = array<i64: 8, 32>}, {pipeline_mode = #tpu.pipeline_mode<synchronous>, transform_indices = @transform_1, window_bounds = array<i64: 32, 128>}, {pipeline_mode = #tpu.pipeline_mode<synchronous>, transform_indices = @transform_2, window_bounds = array<i64: 1, 128>}, {pipeline_mode = #tpu.pipeline_mode<synchronous>, transform_indices = @transform_3, window_bounds = array<i64: 1, 128>}, {transform_indices = @transform_4, window_bounds = array<i64: 8, 128>}]} {
    %c0 = arith.constant 0 : index
    %c0_0 = arith.constant 0 : index
    %0 = vector.load %arg1[%c0, %c0_0] : memref<8x32xf32, #tpu.memory_space<vmem>>, vector<8x32xf32>
    %c0_1 = arith.constant 0 : index
    %c0_2 = arith.constant 0 : index
    %1 = vector.load %arg2[%c0_1, %c0_2] : memref<32x128xf32, #tpu.memory_space<vmem>>, vector<32x128xf32>
    %c0_3 = arith.constant 0 : index
    %c0_4 = arith.constant 0 : index
    %2 = vector.load %arg3[%c0_3, %c0_4] : memref<1x128xf32, #tpu.memory_space<vmem>>, vector<1x128xf32>
    %c0_5 = arith.constant 0 : index
    %c0_6 = arith.constant 0 : index
    %3 = vector.load %arg4[%c0_5, %c0_6] : memref<1x128xf32, #tpu.memory_space<vmem>>, vector<1x128xf32>
    %cst = arith.constant dense<0.000000e+00> : vector<8x128xf32>
    %4 = tpu.matmul %0, %1, %cst {dimension_numbers = #tpu.dot_dimension_numbers<[1], [0], [0], [1], [0, 0, 1, 1], [], []>} : vector<8x32xf32>, vector<32x128xf32>, vector<8x128xf32> -> vector<8x128xf32>
    %5 = arith.mulf %0, %0 : vector<8x32xf32>
    %cst_7 = arith.constant dense<0.000000e+00> : vector<8xf32>
    %6 = vector.multi_reduction <add>, %5, %cst_7 [1] : vector<8x32xf32> to vector<8xf32>
    %7 = vector.shape_cast %6 : vector<8xf32> to vector<8x1xf32>
    %cst_8 = arith.constant 2.000000e+00 : f32
    %8 = vector.broadcast %cst_8 : f32 to vector<8x128xf32>
    %9 = arith.mulf %8, %4 : vector<8x128xf32>
    %10 = vector.broadcast %7 : vector<8x1xf32> to vector<8x128xf32>
    %11 = arith.subf %10, %9 : vector<8x128xf32>
    %12 = vector.broadcast %3 : vector<1x128xf32> to vector<8x128xf32>
    %13 = arith.addf %11, %12 : vector<8x128xf32>
    %cst_9 = arith.constant 0.000000e+00 : f32
    %14 = vector.broadcast %cst_9 : f32 to vector<8x128xf32>
    %15 = arith.maximumf %13, %14 : vector<8x128xf32>
    %16 = vector.broadcast %2 : vector<1x128xf32> to vector<8x128xf32>
    %17 = arith.mulf %15, %16 : vector<8x128xf32>
    %18 = arith.mulf %17, %17 : vector<8x128xf32>
    %cst_10 = arith.constant 0.000000e+00 : f32
    %19 = vector.broadcast %cst_10 : f32 to vector<8x128xf32>
    %20 = arith.subf %19, %18 : vector<8x128xf32>
    %21 = math.exp %20 : vector<8x128xf32>
    %c0_11 = arith.constant 0 : index
    %c0_12 = arith.constant 0 : index
    %22 = vector.load %arg5[%c0_11, %c0_12] : memref<8x128xf32, #tpu.memory_space<vmem>>, vector<8x128xf32>
    tpu.vector_store %arg5[%c0_11, %c0_12], %21 {strides = array<i32>} : memref<8x128xf32, #tpu.memory_space<vmem>>, vector<8x128xf32>,
    return
  }
  func.func @transform_0(%arg0: i32) -> (i32, i32) {
    %c0_i32 = arith.constant 0 : i32
    %c0_i32_0 = arith.constant 0 : i32
    return %arg0, %c0_i32 : i32, i32
  }
  func.func @transform_1(%arg0: i32) -> (i32, i32) {
    %c0_i32 = arith.constant 0 : i32
    %c0_i32_0 = arith.constant 0 : i32
    %c0_i32_1 = arith.constant 0 : i32
    return %c0_i32, %c0_i32_0 : i32, i32
  }
  func.func @transform_2(%arg0: i32) -> (i32, i32) {
    %c0_i32 = arith.constant 0 : i32
    %c0_i32_0 = arith.constant 0 : i32
    %c0_i32_1 = arith.constant 0 : i32
    return %c0_i32, %c0_i32_0 : i32, i32
  }
  func.func @transform_3(%arg0: i32) -> (i32, i32) {
    %c0_i32 = arith.constant 0 : i32
    %c0_i32_0 = arith.constant 0 : i32
    %c0_i32_1 = arith.constant 0 : i32
    return %c0_i32, %c0_i32_0 : i32, i32
  }
  func.func @transform_4(%arg0: i32) -> (i32, i32) {
    %c0_i32 = arith.constant 0 : i32
    %c0_i32_0 = arith.constant 0 : i32
    return %arg0, %c0_i32 : i32, i32
  }
}

</mosaic_0001>

<llo_original>
// kernel: tpu_custom_call.1
$region0: #{tpu_custom_call.1}
  #allocation0 [shape = 'u32[]', space=smem, size = 0x4, offset = 0x4, fixed_abs, tag = 'smem constant byte address 0x4 - core index']
  #allocation1 [shape = 'u32[72,128]{1,0:T(1,128)}', space=vmem, size = 0x9000, scoped, tag = 'internal scratch']
  %s0 = inlined_call_operand.hbm [shape: f32[8,32], index: 0, kind: input, shape index: {}]
  %s1 = inlined_call_operand.hbm [shape: f32[32,128], index: 1, kind: input, shape index: {}]
  %s2 = inlined_call_operand.vmem [shape: f32[1,128], index: 2, kind: input, shape index: {}]
  %s3 = inlined_call_operand.vmem [shape: f32[1,128], index: 3, kind: input, shape index: {}]
  %s4 = inlined_call_operand.hbm [shape: f32[8,128], index: 4, kind: output, shape index: {}]
  %s5 = sld [smem:[#allocation0]]
  $region34: #{tpu_custom_call.1} parent=0
    _
  %s7 = ssub.s32 1, %s5
  %s8 = scalar_select 0, %s7, %s5
  $region1: #{tpu_custom_call.1} parent=0
    #allocation2 [shape = 'u8[4096]{0}', space=vmem, size = 0x1000, scoped, tag = 'input window, operand 0, single buffered']
    #allocation3 [shape = 's32[1]{0}', space=sflag, size = 0x4, scoped, tag = 'scoped memory for tpu_custom_call.1']
    #allocation4 [shape = 's32[1]{0}', space=sflag, size = 0x4, scoped, tag = 'scoped memory for tpu_custom_call.1']
    #allocation5 [shape = 'u8[16384]{0}', space=vmem, size = 0x4000, scoped, tag = 'input window, operand 1, single buffered']
    #allocation6 [shape = 's32[1]{0}', space=sflag, size = 0x4, scoped, tag = 'scoped memory for tpu_custom_call.1']
    #allocation7 [shape = 'u8[4096]{0}', space=vmem, size = 0x1000, scoped, tag = 'output window, operand 0, single buffered']
    %9 = vsyncpa [#allocation3], 0
    %10 = vsyncpa [#allocation6], 0
    %11 = vsyncpa [#allocation4], 0
    // Predicated region
    $region2: #{tpu_custom_call.1} parent=1 // pred_check
      _
    $region3: #{tpu_custom_call.1} parent=1 // pred_check_branch
      %13 = sbr.rel (0) target = $region5
    $region4: #{tpu_custom_call.1} parent=1 // pred_region
      %15 = vsyncadd [#allocation3], 0
      %s17 = sshll.u32 %s0, 4
      %s18 = int_to_ptr.hbm [resolvable:$true] %s17
      %s19 = sshll.u32 [#allocation2], 4
      %s20 = int_to_ptr.vmem [resolvable:$true] %s19
      %22 = dma.hbm_to_vmem [thread:$0]  %s18, 128, %s20, [#allocation3]
    $region5: #{tpu_custom_call.1} parent=1 // pred_fallthru
      _
    // Predicated region
    $region6: #{tpu_custom_call.1} parent=1 // pred_check
      _
    $region7: #{tpu_custom_call.1} parent=1 // pred_check_branch
      %24 = sbr.rel (0) target = $region9
    $region8: #{tpu_custom_call.1} parent=1 // pred_region
      %26 = vsyncadd [#allocation6], 0
      %s27 = sshll.u32 %s1, 4
      %s28 = int_to_ptr.hbm [resolvable:$true] %s27
      %s29 = sshll.u32 [#allocation5], 4
      %s30 = int_to_ptr.vmem [resolvable:$true] %s29
      %35 = dma.hbm_to_vmem [thread:$0]  %s28, 512, %s30, [#allocation6], 128, 128, 8
    $region9: #{tpu_custom_call.1} parent=1 // pred_fallthru
      _
    // Predicated region
    $region10: #{tpu_custom_call.1} parent=1 // pred_check
      _
    $region11: #{tpu_custom_call.1} parent=1 // pred_check_branch
      %37 = sbr.rel (0) target = $region13
    $region12: #{tpu_custom_call.1} parent=1 // pred_region
      _
    $region13: #{tpu_custom_call.1} parent=1 // pred_fallthru
      _
    // Predicated region
    $region14: #{tpu_custom_call.1} parent=1 // pred_check
      _
    $region15: #{tpu_custom_call.1} parent=1 // pred_check_branch
      %39 = sbr.rel (0) target = $region17
    $region16: #{tpu_custom_call.1} parent=1 // pred_region
      _
    $region17: #{tpu_custom_call.1} parent=1 // pred_fallthru
      _
    // Predicated region
    $region18: #{tpu_custom_call.1} parent=1 // pred_check
      _
    $region19: #{tpu_custom_call.1} parent=1 // pred_check_branch
      %41 = sbr.rel (0) target = $region21
    $region20: #{tpu_custom_call.1} parent=1 // pred_region
      %43 = dma.done [#allocation3], 128
    $region21: #{tpu_custom_call.1} parent=1 // pred_fallthru
      _
    // Predicated region
    $region22: #{tpu_custom_call.1} parent=1 // pred_check
      _
    $region23: #{tpu_custom_call.1} parent=1 // pred_check_branch
      %45 = sbr.rel (0) target = $region25
    $region24: #{tpu_custom_call.1} parent=1 // pred_region
      %47 = dma.done [#allocation6], 512
    $region25: #{tpu_custom_call.1} parent=1 // pred_fallthru
      _
    %v48 = vld [vmem:[#allocation2] sm:$0xff]
    %v49 = vld [vmem:[#allocation5] sm:$0xff]
    %v50 = vld [vmem:[#allocation5 + $0x8] sm:$0xff]
    %v51 = vld [vmem:[#allocation5 + $0x10] sm:$0xff]
    %v52 = vld [vmem:[#allocation5 + $0x18] sm:$0xff]
    %v53 = vld [vmem:[%s2] sm:$0x1]
    %v54 = vld [vmem:[%s3] sm:$0x1]
    %vm55 = vcmask 261120
    %v57 = vsel %vm55, %v48, 0
    %59 = vmatpush.msra.mxu0 0.0
    %60 = vmatpush.msra.mxu0 0.0
    %61 = vmatpush.msra.mxu0 0.0
    %62 = vmatpush.msra.mxu0 0.0
    %63 = vmatpush.msra.mxu0 0.0
    %64 = vmatpush.msra.mxu0 0.0
    %65 = vmatpush.msra.mxu0 0.0
    %66 = vmatpush.msra.mxu0 0.0
    %67 = vmatpush.msra.mxu0 0.0
    %68 = vmatpush.msra.mxu0 0.0
    %69 = vmatpush.msra.mxu0 0.0
    %70 = vmatpush.msra.mxu0 0.0
    %71 = vmatpush.msra.mxu0 %v52
    %72 = vmatpush.msra.mxu0 %v51
    %73 = vmatpush.msra.mxu0 %v50
    %74 = vmatpush.msra.mxu0 %v49
    %75 = vmatmul.f32.gmra.mxu0 %v57
    %v76 = vpop.f32.mrf.mxu0
    %v77 = vadd.f32 0.0, %v76
    %78 = vdwg.mxu0
    %v79 = vmul.f32 %v48, %v48
    %v80 = vsel %vm55, %v79, 0.0
    %81 = vadd.xlane.f32.xlu0 %v80
    %v82 = vpop.xlane.xlu0 %81
    %v83 = vmul.f32 %v77, 2.0
    %v84 = vsub.f32 %v82, %v83
    %v86 = vperm.slane %v54, 0
    %v88 = vadd.f32 %v84, %v86
    %v89 = vmax.f32 %v88, 0.0
    %v91 = vperm.slane %v53, 0
    %v93 = vmul.f32 %v89, %v91
    %v94 = vmul.f32 %v93, %v93
    %v95 = vsub.f32 0.0, %v94
    %v96 = vmul.f32 %v95, 1.442695
    %v97 = vpow.pop %v96
    %98 = vst [vmem:[#allocation7] sm:$0xff] %v97
    // Predicated region
    $region26: #{tpu_custom_call.1} parent=1 // pred_check
      _
    $region27: #{tpu_custom_call.1} parent=1 // pred_check_branch
      %100 = sbr.rel (0) target = $region29
    $region28: #{tpu_custom_call.1} parent=1 // pred_region
      %102 = vsyncadd [#allocation4], 0
      %s104 = sshll.u32 [#allocation7], 4
      %s105 = int_to_ptr.vmem [resolvable:$true] %s104
      %s106 = sshll.u32 %s4, 4
      %s107 = int_to_ptr.hbm [resolvable:$true] %s106
      %109 = dma.vmem_to_hbm [thread:$0]  %s105, 128, %s107, [#allocation4]
    $region29: #{tpu_custom_call.1} parent=1 // pred_fallthru
      _
    // Predicated region
    $region30: #{tpu_custom_call.1} parent=1 // pred_check
      _
    $region31: #{tpu_custom_call.1} parent=1 // pred_check_branch
      %111 = sbr.rel (0) target = $region33
    $region32: #{tpu_custom_call.1} parent=1 // pred_region
      %113 = dma.done [#allocation4], 128
    $region33: #{tpu_custom_call.1} parent=1 // pred_fallthru
      _
    %114 = vsyncpa [#allocation3], 1
    %115 = vsyncpa [#allocation6], 1
    %116 = vsyncpa [#allocation4], 1

</llo_original>
